<compile_context>
chip_gen: v5e
topology: v5e:2x2
jax: 0.10.0
libtpu: 0.0.40
codegen_flags: <defaults>
</compile_context>

<pallas_src>
import jax
import jax.numpy as jnp
from jax import lax
from jax.experimental import pallas as pl
from jax.experimental.pallas import tpu as pltpu


def _round_up(a, b):
    return ((a + b - 1) // b) * b


# ----------------------------------------------------------------------------
# Fused ResBlockV1 kernel
# ----------------------------------------------------------------------------
def _make_resblock_kernel(*, K, s, Cin, Cout, Wo, left2, rp, qp, inv_m, eps,
                          slope, has_proj):
    f32 = jnp.float32

    def kernel(*refs):
        if has_proj:
            (xph, mask_r, w1s, g1, b1, w2s, g2, b2, wp, gp, bp,
             o_ref, op1, op2, a1, a2, ap, h_ref) = refs
        else:
            (xph, mask_r, w1s, g1, b1, w2s, g2, b2,
             o_ref, op1, op2, a1, a2, h_ref) = refs

        mask = mask_r[...]              # (1, Wo) f32: 1.0 on valid (n, t) lanes

        def bn_scale_shift(acc_ref, g_ref, b_ref):
            # PyTorch BatchNorm1d training-mode batch stats (biased variance),
            # folded to y = acc * scale + shift.  Halo/pad lanes masked out.
            a = acc_ref[...]
            mean = (a * mask).sum(axis=-1, keepdims=True) * inv_m
            d = (a - mean) * mask
            var = (d * d).sum(axis=-1, keepdims=True) * inv_m
            scale = g_ref[...] * lax.rsqrt(var + eps)
            shift = b_ref[...] - mean * scale
            return scale, shift

        # ---- conv1: stack K taps into one (K*Cin, Wo) VMEM operand, one dot --
        for k in range(K):
            r, q = k % s, k // s
            op1[k * Cin:(k + 1) * Cin, :] = xph[r, :, q:q + Wo]
        a1[...] = jnp.dot(w1s[...], op1[...], preferred_element_type=f32)
        sc1, sh1 = bn_scale_shift(a1, g1, b1)

        # ---- BN1 + LeakyReLU -> bf16 h slab.  `mask` zeroes the per-batch halo
        # columns inside the slab (= conv2's zero padding); only the physical
        # margins of the uninitialised scratch get an explicit (tiny) zero. ----
        h1 = a1[...] * sc1 + sh1
        h1 = jnp.where(h1 >= 0, h1, slope * h1) * mask
        h_ref[:, left2:left2 + Wo] = h1.astype(h_ref.dtype)
        Hw = h_ref.shape[-1]
        if left2 > 0:
            h_ref[:, :left2] = jnp.zeros((Cout, left2), h_ref.dtype)
        if Hw > left2 + Wo:
            h_ref[:, left2 + Wo:] = jnp.zeros((Cout, Hw - left2 - Wo),
                                              h_ref.dtype)

        # ---- conv2 (stride 1): stacked operand straight out of VMEM ----------
        for k in range(K):
            op2[k * Cout:(k + 1) * Cout, :] = h_ref[:, k:k + Wo]
        a2[...] = jnp.dot(w2s[...], op2[...], preferred_element_type=f32)
        sc2, sh2 = bn_scale_shift(a2, g2, b2)

        # ---- residual branch: reuses the already-resident x_ph slab ----------
        if has_proj:
            ap[...] = jnp.dot(wp[...], xph[rp, :, qp:qp + Wo],
                              preferred_element_type=f32)
            scp, shp = bn_scale_shift(ap, gp, bp)
            res = ap[...] * scp + shp
        else:
            # Exact-position identity skip (bf16-rounded, same tolerance class
            # as the bf16 conv operands).
            res = xph[rp, :, qp:qp + Wo].astype(f32)

        y = a2[...] * sc2 + sh2 + res
        o_ref[...] = jnp.where(y >= 0, y, slope * y).astype(o_ref.dtype)

    return kernel


def _full_spec(a):
    nd = a.ndim
    return pl.BlockSpec(a.shape, lambda i, _nd=nd: (0,) * _nd)


# ----------------------------------------------------------------------------
# ResBlockV1 wrapper
# ----------------------------------------------------------------------------
def res_block_v1(x_ncl, params, *, kernel_size, stride, negative_slope=0.2,
                 eps=1e-5):
    """x_ncl: (N, Cin, L) -> (N, Cout, L1).  Matches the PyTorch ResBlockV1
    forward (bias-free convs + fresh BatchNorm1d layers, training-mode stats)."""
    N, Cin, L = x_ncl.shape
    K, s = kernel_size, stride
    Cout = params["w1"].shape[0]
    has_proj = "proj_w" in params
    assert 1 <= K <= 128 and s >= 1

    bf16, f32 = jnp.bfloat16, jnp.float32

    L1 = (L - 1) // s + 1              # conv1 / projection output length
    left_p = (K - 1) // 2              # left pad of conv1 and conv2 (dilation=1)
    q_max = (K - 1) // s               # max per-phase lane offset used by conv1
    Tph = L1 + q_max                   # per-batch phase length needed by conv1
    Tu = L1 + (K - 1)                  # per-batch slab segment (valid + halos)
    Wu = N * Tu                        # occupied slab width (batch folded in lanes)
    Wo = _round_up(Wu, 128)            # lane-dense slab width of all conv outputs
    Xw = Wo + 128                      # x_ph lane width (tap-shift headroom)
    Hw = Wo + 128                      # h scratch lane width (conv2 halo headroom)

    # Stride-phase decomposition of the conv1-padded input with the batch folded
    # into the lane axis: phase r holds x_pad[..., j*s + r]; batch n's samples
    # live at lane columns [n*Tu + left_p, n*Tu + left_p + Tph).  Output column
    # n*Tu + left_p + t of every conv then reads tap k at a constant global lane
    # shift (+k//s for conv1, +k for conv2 on h, +left_p//s for projection and
    # identity skip), so every conv is a single stacked MXU dot.
    pad_r = Tph * s - L - left_p
    x_pad = jnp.pad(x_ncl, ((0, 0), (0, 0), (left_p, max(pad_r, 0))))
    x_pad = x_pad[:, :, :Tph * s]
    x_phase = jnp.transpose(x_pad.reshape(N, Cin, Tph, s), (3, 1, 0, 2))
    x_seg = jnp.pad(x_phase, ((0, 0), (0, 0), (0, 0), (0, Tu - Tph)))
    x_flat = x_seg.reshape(s, Cin, Wu)
    x_ph = jnp.pad(x_flat, ((0, 0), (0, 0), (left_p, Xw - Wu - left_p)))
    x_ph = x_ph.astype(bf16)

    # Valid-column mask: 1 on the N*L1 real output positions, 0 on halo/pad.
    cols = jnp.arange(Wo)
    jmod = cols % Tu
    mask = ((cols < Wu) & (jmod >= left_p) & (jmod < left_p + L1))
    mask = mask.astype(f32).reshape(1, Wo)

    # Stacked conv weights: weight column k*C + c  <->  operand row k*C + c.
    w1s = jnp.transpose(params["w1"], (0, 2, 1)).reshape(Cout, K * Cin)
    w2s = jnp.transpose(params["w2"], (0, 2, 1)).reshape(Cout, K * Cout)

    inputs = [
        x_ph,
        mask,
        w1s.astype(bf16),
        params["gamma1"].reshape(Cout, 1).astype(f32),
        params["beta1"].reshape(Cout, 1).astype(f32),
        w2s.astype(bf16),
        params["gamma2"].reshape(Cout, 1).astype(f32),
        params["beta2"].reshape(Cout, 1).astype(f32),
    ]
    if has_proj:
        inputs += [
            params["proj_w"][:, :, 0].astype(bf16),
            params["proj_gamma"].reshape(Cout, 1).astype(f32),
            params["proj_beta"].reshape(Cout, 1).astype(f32),
        ]

    kernel = _make_resblock_kernel(
        K=K, s=s, Cin=Cin, Cout=Cout, Wo=Wo, left2=left_p,
        rp=left_p % s, qp=left_p // s, inv_m=1.0 / float(N * L1),
        eps=eps, slope=negative_slope, has_proj=has_proj)

    scratch = [
        pltpu.VMEM((K * Cin, Wo), bf16),    # op1: stacked conv1 operand
        pltpu.VMEM((K * Cout, Wo), bf16),   # op2: stacked conv2 operand
        pltpu.VMEM((Cout, Wo), f32),        # a1:  conv1 pre-BN accumulator
        pltpu.VMEM((Cout, Wo), f32),        # a2:  conv2 pre-BN accumulator
    ]
    if has_proj:
        scratch.append(pltpu.VMEM((Cout, Wo), f32))   # ap: projection accumulator
    scratch.append(pltpu.VMEM((Cout, Hw), bf16))      # h:  conv1 activation slab

    out_slab = pl.pallas_call(
        kernel,
        out_shape=jax.ShapeDtypeStruct((Cout, Wo), f32),
        grid=(1,),
        in_specs=[_full_spec(a) for a in inputs],
        out_specs=pl.BlockSpec((Cout, Wo), lambda i: (0, 0)),
        scratch_shapes=scratch,
        compiler_params=pltpu.CompilerParams(
            dimension_semantics=("arbitrary",)),
    )(*inputs)

    # Lane-dense (Cout, Wo) slab -> NCL; pure layout plumbing in the wrapper.
    out = out_slab[:, :Wu].reshape(Cout, N, Tu)[:, :, left_p:left_p + L1]
    return jnp.transpose(out, (1, 0, 2))


# ----------------------------------------------------------------------------
# Pure-JAX (f32) reference of the PyTorch module's forward pass
# ----------------------------------------------------------------------------
def _conv1d_same(x, w, stride):
    K = w.shape[-1]
    lp = (K - 1) // 2
    rp = (K - 1) - lp
    xp = jnp.pad(x, ((0, 0), (0, 0), (lp, rp)))
    return lax.conv_general_dilated(
        xp, w, window_strides=(stride,), padding="VALID",
        dimension_numbers=("NCH", "OIH", "NCH"))


def _bn_train(x, gamma, beta, eps):
    mean = jnp.mean(x, axis=(0, 2), keepdims=True)
    var = jnp.var(x, axis=(0, 2), keepdims=True)      # biased, as PyTorch uses
    return (x - mean) * lax.rsqrt(var + eps) * gamma.reshape(1, -1, 1) \
        + beta.reshape(1, -1, 1)


def res_block_v1_ref(x, params, *, kernel_size, stride, negative_slope=0.2,
                     eps=1e-5):
    def leaky(v):
        return jnp.where(v >= 0, v, negative_slope * v)
    if "proj_w" in params:
        res = _conv1d_same(x, params["proj_w"], stride)
        res = _bn_train(res, params["proj_gamma"], params["proj_beta"], eps)
    else:
        res = x
    h = _conv1d_same(x, params["w1"], stride)
    h = leaky(_bn_train(h, params["gamma1"], params["beta1"], eps))
    o = _conv1d_same(h, params["w2"], 1)
    o = _bn_train(o, params["gamma2"], params["beta2"], eps)
    return leaky(o + res)


# ----------------------------------------------------------------------------
# Parameter init (matches the PyTorch module's parameter set)
# ----------------------------------------------------------------------------
def init_res_block_params(key, in_channels, out_channels, kernel_size, stride):
    ks = jax.random.split(key, 9)
    p = {}
    w_scale = 0.1
    if not (stride == 1 and in_channels == out_channels):
        p["proj_w"] = w_scale * jax.random.normal(
            ks[0], (out_channels, in_channels, 1), jnp.float32)
        p["proj_gamma"] = 1.0 + 0.1 * jax.random.normal(ks[1], (out_channels,), jnp.float32)
        p["proj_beta"] = 0.1 * jax.random.normal(ks[2], (out_channels,), jnp.float32)
    p["w1"] = w_scale * jax.random.normal(
        ks[3], (out_channels, in_channels, kernel_size), jnp.float32)
    p["gamma1"] = 1.0 + 0.1 * jax.random.normal(ks[4], (out_channels,), jnp.float32)
    p["beta1"] = 0.1 * jax.random.normal(ks[5], (out_channels,), jnp.float32)
    p["w2"] = w_scale * jax.random.normal(
        ks[6], (out_channels, out_channels, kernel_size), jnp.float32)
    p["gamma2"] = 1.0 + 0.1 * jax.random.normal(ks[7], (out_channels,), jnp.float32)
    p["beta2"] = 0.1 * jax.random.normal(ks[8], (out_channels,), jnp.float32)
    return p


# ----------------------------------------------------------------------------
if __name__ == "__main__":
    key = jax.random.PRNGKey(0)
    k_x, k_p1, k_p2 = jax.random.split(key, 3)

    # Config 1: downsampling block with projection shortcut.
    N, Cin, L = 2, 4, 16
    Cout, K, stride = 8, 3, 2
    x = jax.random.normal(k_x, (N, Cin, L), jnp.float32)
    params1 = init_res_block_params(k_p1, Cin, Cout, K, stride)
    y1 = jax.block_until_ready(
        res_block_v1(x, params1, kernel_size=K, stride=stride))
    assert y1.shape == (N, Cout, L // stride)
    r1 = res_block_v1_ref(x, params1, kernel_size=K, stride=stride)
    err1 = float(jnp.max(jnp.abs(y1 - r1)))
    assert err1 < 0.25, f"config1 max abs err {err1}"

    # Config 2: identity-shortcut path (stride=1, in_channels == out_channels).
    params2 = init_res_block_params(k_p2, Cin, Cin, K, 1)
    y2 = jax.block_until_ready(
        res_block_v1(x, params2, kernel_size=K, stride=1))
    assert y2.shape == (N, Cin, L)
    r2 = res_block_v1_ref(x, params2, kernel_size=K, stride=1)
    err2 = float(jnp.max(jnp.abs(y2 - r2)))
    assert err2 < 0.25, f"config2 max abs err {err2}"

    print("KERNEL_OK")
</pallas_src>

<mosaic_0001>
module attributes {stable_mosaic.version = 11 : i64} {
  func.func @kernel(%arg0: i32, %arg1: memref<2x4x256xbf16, #tpu.memory_space<vmem>>, %arg2: memref<1x128xf32, #tpu.memory_space<vmem>>, %arg3: memref<8x12xbf16, #tpu.memory_space<vmem>>, %arg4: memref<8x1xf32, #tpu.memory_space<vmem>>, %arg5: memref<8x1xf32, #tpu.memory_space<vmem>>, %arg6: memref<8x24xbf16, #tpu.memory_space<vmem>>, %arg7: memref<8x1xf32, #tpu.memory_space<vmem>>, %arg8: memref<8x1xf32, #tpu.memory_space<vmem>>, %arg9: memref<8x4xbf16, #tpu.memory_space<vmem>>, %arg10: memref<8x1xf32, #tpu.memory_space<vmem>>, %arg11: memref<8x1xf32, #tpu.memory_space<vmem>>, %arg12: memref<8x128xf32, #tpu.memory_space<vmem>>, %arg13: memref<12x128xbf16, #tpu.memory_space<vmem>>, %arg14: memref<24x128xbf16, #tpu.memory_space<vmem>>, %arg15: memref<8x128xf32, #tpu.memory_space<vmem>>, %arg16: memref<8x128xf32, #tpu.memory_space<vmem>>, %arg17: memref<8x128xf32, #tpu.memory_space<vmem>>, %arg18: memref<8x256xbf16, #tpu.memory_space<vmem>>) attributes {dimension_semantics = [#tpu.dimension_semantics<arbitrary>], iteration_bounds = array<i64: 1>, scalar_prefetch = 0 : i64, scratch_operands = 6 : i64, tpu.core_type = #tpu.core_type<tc>, window_params = [{pipeline_mode = #tpu.pipeline_mode<synchronous>, transform_indices = @transform_0, window_bounds = array<i64: 2, 4, 256>}, {pipeline_mode = #tpu.pipeline_mode<synchronous>, transform_indices = @transform_1, window_bounds = array<i64: 1, 128>}, {pipeline_mode = #tpu.pipeline_mode<synchronous>, transform_indices = @transform_2, window_bounds = array<i64: 8, 12>}, {pipeline_mode = #tpu.pipeline_mode<synchronous>, transform_indices = @transform_3, window_bounds = array<i64: 8, 1>}, {pipeline_mode = #tpu.pipeline_mode<synchronous>, transform_indices = @transform_4, window_bounds = array<i64: 8, 1>}, {pipeline_mode = #tpu.pipeline_mode<synchronous>, transform_indices = @transform_5, window_bounds = array<i64: 8, 24>}, {pipeline_mode = #tpu.pipeline_mode<synchronous>, transform_indices = @transform_6, window_bounds = array<i64: 8, 1>}, {pipeline_mode = #tpu.pipeline_mode<synchronous>, transform_indices = @transform_7, window_bounds = array<i64: 8, 1>}, {pipeline_mode = #tpu.pipeline_mode<synchronous>, transform_indices = @transform_8, window_bounds = array<i64: 8, 4>}, {pipeline_mode = #tpu.pipeline_mode<synchronous>, transform_indices = @transform_9, window_bounds = array<i64: 8, 1>}, {pipeline_mode = #tpu.pipeline_mode<synchronous>, transform_indices = @transform_10, window_bounds = array<i64: 8, 1>}, {pipeline_mode = #tpu.pipeline_mode<synchronous>, transform_indices = @transform_11, window_bounds = array<i64: 8, 128>}]} {
    %c0 = arith.constant 0 : index
    %c0_0 = arith.constant 0 : index
    %0 = vector.load %arg2[%c0, %c0_0] : memref<1x128xf32, #tpu.memory_space<vmem>>, vector<1x128xf32>
    %c0_1 = arith.constant 0 : index
    %c0_2 = arith.constant 0 : index
    %c0_3 = arith.constant 0 : index
    %1 = vector.load %arg1[%c0_1, %c0_2, %c0_3] : memref<2x4x256xbf16, #tpu.memory_space<vmem>>, vector<1x4x128xbf16>
    %2 = vector.shape_cast %1 : vector<1x4x128xbf16> to vector<4x128xbf16>
    %c0_4 = arith.constant 0 : index
    %c0_5 = arith.constant 0 : index
    %3 = vector.load %arg13[%c0_4, %c0_5] : memref<12x128xbf16, #tpu.memory_space<vmem>>, vector<4x128xbf16>
    tpu.vector_store %arg13[%c0_4, %c0_5], %2 {strides = array<i32>} : memref<12x128xbf16, #tpu.memory_space<vmem>>, vector<4x128xbf16>,
    %c1 = arith.constant 1 : index
    %c0_6 = arith.constant 0 : index
    %c0_7 = arith.constant 0 : index
    %4 = vector.load %arg1[%c1, %c0_6, %c0_7] : memref<2x4x256xbf16, #tpu.memory_space<vmem>>, vector<1x4x128xbf16>
    %5 = vector.shape_cast %4 : vector<1x4x128xbf16> to vector<4x128xbf16>
    %c4 = arith.constant 4 : index
    %c0_8 = arith.constant 0 : index
    %6 = vector.load %arg13[%c4, %c0_8] : memref<12x128xbf16, #tpu.memory_space<vmem>>, vector<4x128xbf16>
    tpu.vector_store %arg13[%c4, %c0_8], %5 {strides = array<i32>} : memref<12x128xbf16, #tpu.memory_space<vmem>>, vector<4x128xbf16>,
    %c0_9 = arith.constant 0 : index
    %c0_10 = arith.constant 0 : index
    %c1_11 = arith.constant 1 : index
    %7 = vector.load %arg1[%c0_9, %c0_10, %c1_11] : memref<2x4x256xbf16, #tpu.memory_space<vmem>>, vector<1x4x128xbf16>
    %8 = vector.shape_cast %7 : vector<1x4x128xbf16> to vector<4x128xbf16>
    %c8 = arith.constant 8 : index
    %c0_12 = arith.constant 0 : index
    %9 = vector.load %arg13[%c8, %c0_12] : memref<12x128xbf16, #tpu.memory_space<vmem>>, vector<4x128xbf16>
    tpu.vector_store %arg13[%c8, %c0_12], %8 {strides = array<i32>} : memref<12x128xbf16, #tpu.memory_space<vmem>>, vector<4x128xbf16>,
    %c0_13 = arith.constant 0 : index
    %c0_14 = arith.constant 0 : index
    %10 = vector.load %arg3[%c0_13, %c0_14] : memref<8x12xbf16, #tpu.memory_space<vmem>>, vector<8x12xbf16>
    %c0_15 = arith.constant 0 : index
    %c0_16 = arith.constant 0 : index
    %11 = vector.load %arg13[%c0_15, %c0_16] : memref<12x128xbf16, #tpu.memory_space<vmem>>, vector<12x128xbf16>
    %cst = arith.constant dense<0.000000e+00> : vector<8x128xf32>
    %12 = tpu.matmul %10, %11, %cst {dimension_numbers = #tpu.dot_dimension_numbers<[1], [0], [0], [1], [0, 0, 1, 1], [], []>} : vector<8x12xbf16>, vector<12x128xbf16>, vector<8x128xf32> -> vector<8x128xf32>
    %c0_17 = arith.constant 0 : index
    %c0_18 = arith.constant 0 : index
    %13 = vector.load %arg15[%c0_17, %c0_18] : memref<8x128xf32, #tpu.memory_space<vmem>>, vector<8x128xf32>
    tpu.vector_store %arg15[%c0_17, %c0_18], %12 {strides = array<i32>} : memref<8x128xf32, #tpu.memory_space<vmem>>, vector<8x128xf32>,
    %c0_19 = arith.constant 0 : index
    %c0_20 = arith.constant 0 : index
    %14 = vector.load %arg15[%c0_19, %c0_20] : memref<8x128xf32, #tpu.memory_space<vmem>>, vector<8x128xf32>
    %15 = vector.broadcast %0 : vector<1x128xf32> to vector<8x128xf32>
    %16 = arith.mulf %14, %15 : vector<8x128xf32>
    %cst_21 = arith.constant dense<0.000000e+00> : vector<8xf32>
    %17 = vector.multi_reduction <add>, %16, %cst_21 [1] : vector<8x128xf32> to vector<8xf32>
    %18 = vector.shape_cast %17 : vector<8xf32> to vector<8x1xf32>
    %cst_22 = arith.constant 6.250000e-02 : f32
    %19 = vector.broadcast %cst_22 : f32 to vector<8x1xf32>
    %20 = arith.mulf %18, %19 : vector<8x1xf32>
    %21 = vector.broadcast %20 : vector<8x1xf32> to vector<8x128xf32>
    %22 = arith.subf %14, %21 : vector<8x128xf32>
    %23 = vector.broadcast %0 : vector<1x128xf32> to vector<8x128xf32>
    %24 = arith.mulf %22, %23 : vector<8x128xf32>
    %25 = arith.mulf %24, %24 : vector<8x128xf32>
    %cst_23 = arith.constant dense<0.000000e+00> : vector<8xf32>
    %26 = vector.multi_reduction <add>, %25, %cst_23 [1] : vector<8x128xf32> to vector<8xf32>
    %27 = vector.shape_cast %26 : vector<8xf32> to vector<8x1xf32>
    %cst_24 = arith.constant 6.250000e-02 : f32
    %28 = vector.broadcast %cst_24 : f32 to vector<8x1xf32>
    %29 = arith.mulf %27, %28 : vector<8x1xf32>
    %c0_25 = arith.constant 0 : index
    %c0_26 = arith.constant 0 : index
    %30 = vector.load %arg4[%c0_25, %c0_26] : memref<8x1xf32, #tpu.memory_space<vmem>>, vector<8x1xf32>
    %cst_27 = arith.constant 9.99999974E-6 : f32
    %31 = vector.broadcast %cst_27 : f32 to vector<8x1xf32>
    %32 = arith.addf %29, %31 : vector<8x1xf32>
    %33 = math.rsqrt %32 : vector<8x1xf32>
    %34 = arith.mulf %30, %33 : vector<8x1xf32>
    %c0_28 = arith.constant 0 : index
    %c0_29 = arith.constant 0 : index
    %35 = vector.load %arg5[%c0_28, %c0_29] : memref<8x1xf32, #tpu.memory_space<vmem>>, vector<8x1xf32>
    %36 = arith.mulf %20, %34 : vector<8x1xf32>
    %37 = arith.subf %35, %36 : vector<8x1xf32>
    %c0_30 = arith.constant 0 : index
    %c0_31 = arith.constant 0 : index
    %38 = vector.load %arg15[%c0_30, %c0_31] : memref<8x128xf32, #tpu.memory_space<vmem>>, vector<8x128xf32>
    %39 = vector.broadcast %34 : vector<8x1xf32> to vector<8x128xf32>
    %40 = arith.mulf %38, %39 : vector<8x128xf32>
    %41 = vector.broadcast %37 : vector<8x1xf32> to vector<8x128xf32>
    %42 = arith.addf %40, %41 : vector<8x128xf32>
    %cst_32 = arith.constant 0.000000e+00 : f32
    %43 = vector.broadcast %cst_32 : f32 to vector<8x128xf32>
    %44 = arith.cmpf oge, %42, %43 : vector<8x128xf32>
    %cst_33 = arith.constant 2.000000e-01 : f32
    %45 = vector.broadcast %cst_33 : f32 to vector<8x128xf32>
    %46 = arith.mulf %45, %42 : vector<8x128xf32>
    %47 = arith.select %44, %42, %46 : vector<8x128xi1>, vector<8x128xf32>
    %48 = vector.broadcast %0 : vector<1x128xf32> to vector<8x128xf32>
    %49 = arith.mulf %47, %48 : vector<8x128xf32>
    %50 = arith.truncf %49 : vector<8x128xf32> to vector<8x128xbf16>
    %c0_34 = arith.constant 0 : index
    %c1_35 = arith.constant 1 : index
    %51 = vector.load %arg18[%c0_34, %c1_35] : memref<8x256xbf16, #tpu.memory_space<vmem>>, vector<8x128xbf16>
    tpu.vector_store %arg18[%c0_34, %c1_35], %50 {strides = array<i32>} : memref<8x256xbf16, #tpu.memory_space<vmem>>, vector<8x128xbf16>,
    %cst_36 = arith.constant 0.000000e+00 : bf16
    %52 = vector.broadcast %cst_36 : bf16 to vector<8x1xbf16>
    %c0_37 = arith.constant 0 : index
    %c0_38 = arith.constant 0 : index
    %53 = vector.load %arg18[%c0_37, %c0_38] : memref<8x256xbf16, #tpu.memory_space<vmem>>, vector<8x1xbf16>
    tpu.vector_store %arg18[%c0_37, %c0_38], %52 {strides = array<i32>} : memref<8x256xbf16, #tpu.memory_space<vmem>>, vector<8x1xbf16>,
    %cst_39 = arith.constant 0.000000e+00 : bf16
    %54 = vector.broadcast %cst_39 : bf16 to vector<8x127xbf16>
    %c0_40 = arith.constant 0 : index
    %c129 = arith.constant 129 : index
    %55 = vector.load %arg18[%c0_40, %c129] : memref<8x256xbf16, #tpu.memory_space<vmem>>, vector<8x127xbf16>
    tpu.vector_store %arg18[%c0_40, %c129], %54 {strides = array<i32>} : memref<8x256xbf16, #tpu.memory_space<vmem>>, vector<8x127xbf16>,
    %c0_41 = arith.constant 0 : index
    %c0_42 = arith.constant 0 : index
    %56 = vector.load %arg18[%c0_41, %c0_42] : memref<8x256xbf16, #tpu.memory_space<vmem>>, vector<8x128xbf16>
    %c0_43 = arith.constant 0 : index
    %c0_44 = arith.constant 0 : index
    %57 = vector.load %arg14[%c0_43, %c0_44] : memref<24x128xbf16, #tpu.memory_space<vmem>>, vector<8x128xbf16>
    tpu.vector_store %arg14[%c0_43, %c0_44], %56 {strides = array<i32>} : memref<24x128xbf16, #tpu.memory_space<vmem>>, vector<8x128xbf16>,
    %c0_45 = arith.constant 0 : index
    %c1_46 = arith.constant 1 : index
    %58 = vector.load %arg18[%c0_45, %c1_46] : memref<8x256xbf16, #tpu.memory_space<vmem>>, vector<8x128xbf16>
    %c8_47 = arith.constant 8 : index
    %c0_48 = arith.constant 0 : index
    %59 = vector.load %arg14[%c8_47, %c0_48] : memref<24x128xbf16, #tpu.memory_space<vmem>>, vector<8x128xbf16>
    tpu.vector_store %arg14[%c8_47, %c0_48], %58 {strides = array<i32>} : memref<24x128xbf16, #tpu.memory_space<vmem>>, vector<8x128xbf16>,
    %c0_49 = arith.constant 0 : index
    %c2 = arith.constant 2 : index
    %60 = vector.load %arg18[%c0_49, %c2] : memref<8x256xbf16, #tpu.memory_space<vmem>>, vector<8x128xbf16>
    %c16 = arith.constant 16 : index
    %c0_50 = arith.constant 0 : index
    %61 = vector.load %arg14[%c16, %c0_50] : memref<24x128xbf16, #tpu.memory_space<vmem>>, vector<8x128xbf16>
    tpu.vector_store %arg14[%c16, %c0_50], %60 {strides = array<i32>} : memref<24x128xbf16, #tpu.memory_space<vmem>>, vector<8x128xbf16>,
    %c0_51 = arith.constant 0 : index
    %c0_52 = arith.constant 0 : index
    %62 = vector.load %arg6[%c0_51, %c0_52] : memref<8x24xbf16, #tpu.memory_space<vmem>>, vector<8x24xbf16>
    %c0_53 = arith.constant 0 : index
    %c0_54 = arith.constant 0 : index
    %63 = vector.load %arg14[%c0_53, %c0_54] : memref<24x128xbf16, #tpu.memory_space<vmem>>, vector<24x128xbf16>
    %cst_55 = arith.constant dense<0.000000e+00> : vector<8x128xf32>
    %64 = tpu.matmul %62, %63, %cst_55 {dimension_numbers = #tpu.dot_dimension_numbers<[1], [0], [0], [1], [0, 0, 1, 1], [], []>} : vector<8x24xbf16>, vector<24x128xbf16>, vector<8x128xf32> -> vector<8x128xf32>
    %c0_56 = arith.constant 0 : index
    %c0_57 = arith.constant 0 : index
    %65 = vector.load %arg16[%c0_56, %c0_57] : memref<8x128xf32, #tpu.memory_space<vmem>>, vector<8x128xf32>
    tpu.vector_store %arg16[%c0_56, %c0_57], %64 {strides = array<i32>} : memref<8x128xf32, #tpu.memory_space<vmem>>, vector<8x128xf32>,
    %c0_58 = arith.constant 0 : index
    %c0_59 = arith.constant 0 : index
    %66 = vector.load %arg16[%c0_58, %c0_59] : memref<8x128xf32, #tpu.memory_space<vmem>>, vector<8x128xf32>
    %67 = vector.broadcast %0 : vector<1x128xf32> to vector<8x128xf32>
    %68 = arith.mulf %66, %67 : vector<8x128xf32>
    %cst_60 = arith.constant dense<0.000000e+00> : vector<8xf32>
    %69 = vector.multi_reduction <add>, %68, %cst_60 [1] : vector<8x128xf32> to vector<8xf32>
    %70 = vector.shape_cast %69 : vector<8xf32> to vector<8x1xf32>
    %cst_61 = arith.constant 6.250000e-02 : f32
    %71 = vector.broadcast %cst_61 : f32 to vector<8x1xf32>
    %72 = arith.mulf %70, %71 : vector<8x1xf32>
    %73 = vector.broadcast %72 : vector<8x1xf32> to vector<8x128xf32>
    %74 = arith.subf %66, %73 : vector<8x128xf32>
    %75 = vector.broadcast %0 : vector<1x128xf32> to vector<8x128xf32>
    %76 = arith.mulf %74, %75 : vector<8x128xf32>
    %77 = arith.mulf %76, %76 : vector<8x128xf32>
    %cst_62 = arith.constant dense<0.000000e+00> : vector<8xf32>
    %78 = vector.multi_reduction <add>, %77, %cst_62 [1] : vector<8x128xf32> to vector<8xf32>
    %79 = vector.shape_cast %78 : vector<8xf32> to vector<8x1xf32>
    %cst_63 = arith.constant 6.250000e-02 : f32
    %80 = vector.broadcast %cst_63 : f32 to vector<8x1xf32>
    %81 = arith.mulf %79, %80 : vector<8x1xf32>
    %c0_64 = arith.constant 0 : index
    %c0_65 = arith.constant 0 : index
    %82 = vector.load %arg7[%c0_64, %c0_65] : memref<8x1xf32, #tpu.memory_space<vmem>>, vector<8x1xf32>
    %cst_66 = arith.constant 9.99999974E-6 : f32
    %83 = vector.broadcast %cst_66 : f32 to vector<8x1xf32>
    %84 = arith.addf %81, %83 : vector<8x1xf32>
    %85 = math.rsqrt %84 : vector<8x1xf32>
    %86 = arith.mulf %82, %85 : vector<8x1xf32>
    %c0_67 = arith.constant 0 : index
    %c0_68 = arith.constant 0 : index
    %87 = vector.load %arg8[%c0_67, %c0_68] : memref<8x1xf32, #tpu.memory_space<vmem>>, vector<8x1xf32>
    %88 = arith.mulf %72, %86 : vector<8x1xf32>
    %89 = arith.subf %87, %88 : vector<8x1xf32>
    %c0_69 = arith.constant 0 : index
    %c0_70 = arith.constant 0 : index
    %90 = vector.load %arg9[%c0_69, %c0_70] : memref<8x4xbf16, #tpu.memory_space<vmem>>, vector<8x4xbf16>
    %c1_71 = arith.constant 1 : index
    %c0_72 = arith.constant 0 : index
    %c0_73 = arith.constant 0 : index
    %91 = vector.load %arg1[%c1_71, %c0_72, %c0_73] : memref<2x4x256xbf16, #tpu.memory_space<vmem>>, vector<1x4x128xbf16>
    %92 = vector.shape_cast %91 : vector<1x4x128xbf16> to vector<4x128xbf16>
    %cst_74 = arith.constant dense<0.000000e+00> : vector<8x128xf32>
    %93 = tpu.matmul %90, %92, %cst_74 {dimension_numbers = #tpu.dot_dimension_numbers<[1], [0], [0], [1], [0, 0, 1, 1], [], []>} : vector<8x4xbf16>, vector<4x128xbf16>, vector<8x128xf32> -> vector<8x128xf32>
    %c0_75 = arith.constant 0 : index
    %c0_76 = arith.constant 0 : index
    %94 = vector.load %arg17[%c0_75, %c0_76] : memref<8x128xf32, #tpu.memory_space<vmem>>, vector<8x128xf32>
    tpu.vector_store %arg17[%c0_75, %c0_76], %93 {strides = array<i32>} : memref<8x128xf32, #tpu.memory_space<vmem>>, vector<8x128xf32>,
    %c0_77 = arith.constant 0 : index
    %c0_78 = arith.constant 0 : index
    %95 = vector.load %arg17[%c0_77, %c0_78] : memref<8x128xf32, #tpu.memory_space<vmem>>, vector<8x128xf32>
    %96 = vector.broadcast %0 : vector<1x128xf32> to vector<8x128xf32>
    %97 = arith.mulf %95, %96 : vector<8x128xf32>
    %cst_79 = arith.constant dense<0.000000e+00> : vector<8xf32>
    %98 = vector.multi_reduction <add>, %97, %cst_79 [1] : vector<8x128xf32> to vector<8xf32>
    %99 = vector.shape_cast %98 : vector<8xf32> to vector<8x1xf32>
    %cst_80 = arith.constant 6.250000e-02 : f32
    %100 = vector.broadcast %cst_80 : f32 to vector<8x1xf32>
    %101 = arith.mulf %99, %100 : vector<8x1xf32>
    %102 = vector.broadcast %101 : vector<8x1xf32> to vector<8x128xf32>
    %103 = arith.subf %95, %102 : vector<8x128xf32>
    %104 = vector.broadcast %0 : vector<1x128xf32> to vector<8x128xf32>
    %105 = arith.mulf %103, %104 : vector<8x128xf32>
    %106 = arith.mulf %105, %105 : vector<8x128xf32>
    %cst_81 = arith.constant dense<0.000000e+00> : vector<8xf32>
    %107 = vector.multi_reduction <add>, %106, %cst_81 [1] : vector<8x128xf32> to vector<8xf32>
    %108 = vector.shape_cast %107 : vector<8xf32> to vector<8x1xf32>
    %cst_82 = arith.constant 6.250000e-02 : f32
    %109 = vector.broadcast %cst_82 : f32 to vector<8x1xf32>
    %110 = arith.mulf %108, %109 : vector<8x1xf32>
    %c0_83 = arith.constant 0 : index
    %c0_84 = arith.constant 0 : index
    %111 = vector.load %arg10[%c0_83, %c0_84] : memref<8x1xf32, #tpu.memory_space<vmem>>, vector<8x1xf32>
    %cst_85 = arith.constant 9.99999974E-6 : f32
    %112 = vector.broadcast %cst_85 : f32 to vector<8x1xf32>
    %113 = arith.addf %110, %112 : vector<8x1xf32>
    %114 = math.rsqrt %113 : vector<8x1xf32>
    %115 = arith.mulf %111, %114 : vector<8x1xf32>
    %c0_86 = arith.constant 0 : index
    %c0_87 = arith.constant 0 : index
    %116 = vector.load %arg11[%c0_86, %c0_87] : memref<8x1xf32, #tpu.memory_space<vmem>>, vector<8x1xf32>
    %117 = arith.mulf %101, %115 : vector<8x1xf32>
    %118 = arith.subf %116, %117 : vector<8x1xf32>
    %c0_88 = arith.constant 0 : index
    %c0_89 = arith.constant 0 : index
    %119 = vector.load %arg17[%c0_88, %c0_89] : memref<8x128xf32, #tpu.memory_space<vmem>>, vector<8x128xf32>
    %120 = vector.broadcast %115 : vector<8x1xf32> to vector<8x128xf32>
    %121 = arith.mulf %119, %120 : vector<8x128xf32>
    %122 = vector.broadcast %118 : vector<8x1xf32> to vector<8x128xf32>
    %123 = arith.addf %121, %122 : vector<8x128xf32>
    %c0_90 = arith.constant 0 : index
    %c0_91 = arith.constant 0 : index
    %124 = vector.load %arg16[%c0_90, %c0_91] : memref<8x128xf32, #tpu.memory_space<vmem>>, vector<8x128xf32>
    %125 = vector.broadcast %86 : vector<8x1xf32> to vector<8x128xf32>
    %126 = arith.mulf %124, %125 : vector<8x128xf32>
    %127 = vector.broadcast %89 : vector<8x1xf32> to vector<8x128xf32>
    %128 = arith.addf %126, %127 : vector<8x128xf32>
    %129 = arith.addf %128, %123 : vector<8x128xf32>
    %cst_92 = arith.constant 0.000000e+00 : f32
    %130 = vector.broadcast %cst_92 : f32 to vector<8x128xf32>
    %131 = arith.cmpf oge, %129, %130 : vector<8x128xf32>
    %cst_93 = arith.constant 2.000000e-01 : f32
    %132 = vector.broadcast %cst_93 : f32 to vector<8x128xf32>
    %133 = arith.mulf %132, %129 : vector<8x128xf32>
    %134 = arith.select %131, %129, %133 : vector<8x128xi1>, vector<8x128xf32>
    %c0_94 = arith.constant 0 : index
    %c0_95 = arith.constant 0 : index
    %135 = vector.load %arg12[%c0_94, %c0_95] : memref<8x128xf32, #tpu.memory_space<vmem>>, vector<8x128xf32>
    tpu.vector_store %arg12[%c0_94, %c0_95], %134 {strides = array<i32>} : memref<8x128xf32, #tpu.memory_space<vmem>>, vector<8x128xf32>,
    return
  }
  func.func @transform_0(%arg0: i32) -> (i32, i32, i32) {
    %c0_i32 = arith.constant 0 : i32
    %c0_i32_0 = arith.constant 0 : i32
    %c0_i32_1 = arith.constant 0 : i32
    %c0_i32_2 = arith.constant 0 : i32
    return %c0_i32, %c0_i32_0, %c0_i32_1 : i32, i32, i32
  }
  func.func @transform_1(%arg0: i32) -> (i32, i32) {
    %c0_i32 = arith.constant 0 : i32
    %c0_i32_0 = arith.constant 0 : i32
    %c0_i32_1 = arith.constant 0 : i32
    return %c0_i32, %c0_i32_0 : i32, i32
  }
  func.func @transform_2(%arg0: i32) -> (i32, i32) {
    %c0_i32 = arith.constant 0 : i32
    %c0_i32_0 = arith.constant 0 : i32
    %c0_i32_1 = arith.constant 0 : i32
    return %c0_i32, %c0_i32_0 : i32, i32
  }
  func.func @transform_3(%arg0: i32) -> (i32, i32) {
    %c0_i32 = arith.constant 0 : i32
    %c0_i32_0 = arith.constant 0 : i32
    %c0_i32_1 = arith.constant 0 : i32
    return %c0_i32, %c0_i32_0 : i32, i32
  }
  func.func @transform_4(%arg0: i32) -> (i32, i32) {
    %c0_i32 = arith.constant 0 : i32
    %c0_i32_0 = arith.constant 0 : i32
    %c0_i32_1 = arith.constant 0 : i32
    return %c0_i32, %c0_i32_0 : i32, i32
  }
  func.func @transform_5(%arg0: i32) -> (i32, i32) {
    %c0_i32 = arith.constant 0 : i32
    %c0_i32_0 = arith.constant 0 : i32
    %c0_i32_1 = arith.constant 0 : i32
    return %c0_i32, %c0_i32_0 : i32, i32
  }
  func.func @transform_6(%arg0: i32) -> (i32, i32) {
    %c0_i32 = arith.constant 0 : i32
    %c0_i32_0 = arith.constant 0 : i32
    %c0_i32_1 = arith.constant 0 : i32
    return %c0_i32, %c0_i32_0 : i32, i32
  }
  func.func @transform_7(%arg0: i32) -> (i32, i32) {
    %c0_i32 = arith.constant 0 : i32
    %c0_i32_0 = arith.constant 0 : i32
    %c0_i32_1 = arith.constant 0 : i32
    return %c0_i32, %c0_i32_0 : i32, i32
  }
  func.func @transform_8(%arg0: i32) -> (i32, i32) {
    %c0_i32 = arith.constant 0 : i32
    %c0_i32_0 = arith.constant 0 : i32
    %c0_i32_1 = arith.constant 0 : i32
    return %c0_i32, %c0_i32_0 : i32, i32
  }
  func.func @transform_9(%arg0: i32) -> (i32, i32) {
    %c0_i32 = arith.constant 0 : i32
    %c0_i32_0 = arith.constant 0 : i32
    %c0_i32_1 = arith.constant 0 : i32
    return %c0_i32, %c0_i32_0 : i32, i32
  }
  func.func @transform_10(%arg0: i32) -> (i32, i32) {
    %c0_i32 = arith.constant 0 : i32
    %c0_i32_0 = arith.constant 0 : i32
    %c0_i32_1 = arith.constant 0 : i32
    return %c0_i32, %c0_i32_0 : i32, i32
  }
  func.func @transform_11(%arg0: i32) -> (i32, i32) {
    %c0_i32 = arith.constant 0 : i32
    %c0_i32_0 = arith.constant 0 : i32
    %c0_i32_1 = arith.constant 0 : i32
    return %c0_i32, %c0_i32_0 : i32, i32
  }
}

</mosaic_0001>

<llo_original>
// kernel: tpu_custom_call.1
$region0: #{tpu_custom_call.1}
  #allocation0 [shape = 'u32[]', space=smem, size = 0x4, offset = 0x4, fixed_abs, tag = 'smem constant byte address 0x4 - core index']
  #allocation1 [shape = 'u32[72,128]{1,0:T(1,128)}', space=vmem, size = 0x9000, scoped, tag = 'internal scratch']
  #allocation2 [shape = 'bf16[12,128]{1,0:T(8,128)(2,1)}', space=vmem, size = 0x1000, scoped, tag = 'scratch operand']
  #allocation3 [shape = 'bf16[24,128]{1,0:T(8,128)(2,1)}', space=vmem, size = 0x1800, scoped, tag = 'scratch operand']
  #allocation4 [shape = 'f32[8,128]{1,0:T(8,128)}', space=vmem, size = 0x1000, scoped, tag = 'scratch operand']
  #allocation5 [shape = 'f32[8,128]{1,0:T(8,128)}', space=vmem, size = 0x1000, scoped, tag = 'scratch operand']
  #allocation6 [shape = 'f32[8,128]{1,0:T(8,128)}', space=vmem, size = 0x1000, scoped, tag = 'scratch operand']
  #allocation7 [shape = 'bf16[8,256]{1,0:T(8,128)(2,1)}', space=vmem, size = 0x1000, scoped, tag = 'scratch operand']
  %s0 = inlined_call_operand.vmem [shape: bf16[2,4,256], index: 0, kind: input, shape index: {}]
  %s1 = inlined_call_operand.vmem [shape: f32[1,128], index: 1, kind: input, shape index: {}]
  %s2 = inlined_call_operand.vmem [shape: bf16[8,12], index: 2, kind: input, shape index: {}]
  %s3 = inlined_call_operand.vmem [shape: f32[8,1], index: 3, kind: input, shape index: {}]
  %s4 = inlined_call_operand.vmem [shape: f32[8,1], index: 4, kind: input, shape index: {}]
  %s5 = inlined_call_operand.vmem [shape: bf16[8,24], index: 5, kind: input, shape index: {}]
  %s6 = inlined_call_operand.vmem [shape: f32[8,1], index: 6, kind: input, shape index: {}]
  %s7 = inlined_call_operand.vmem [shape: f32[8,1], index: 7, kind: input, shape index: {}]
  %s8 = inlined_call_operand.vmem [shape: bf16[8,4], index: 8, kind: input, shape index: {}]
  %s9 = inlined_call_operand.vmem [shape: f32[8,1], index: 9, kind: input, shape index: {}]
  %s10 = inlined_call_operand.vmem [shape: f32[8,1], index: 10, kind: input, shape index: {}]
  %s11 = inlined_call_operand.hbm [shape: f32[8,128], index: 11, kind: output, shape index: {}]
  %s12 = sld [smem:[#allocation0]]
  $region54: #{tpu_custom_call.1} parent=0
    _
  %s14 = ssub.s32 1, %s12
  %s15 = scalar_select 0, %s14, %s12
  $region1: #{tpu_custom_call.1} parent=0
    #allocation8 [shape = 'u8[4096]{0}', space=vmem, size = 0x1000, scoped, tag = 'output window, operand 0, single buffered']
    #allocation9 [shape = 's32[1]{0}', space=sflag, size = 0x4, scoped, tag = 'scoped memory for tpu_custom_call.1']
    %16 = vsyncpa [#allocation9], 0
    // Predicated region
    $region2: #{tpu_custom_call.1} parent=1 // pred_check
      _
    $region3: #{tpu_custom_call.1} parent=1 // pred_check_branch
      %18 = sbr.rel (0) target = $region5
    $region4: #{tpu_custom_call.1} parent=1 // pred_region
      _
    $region5: #{tpu_custom_call.1} parent=1 // pred_fallthru
      _
    // Predicated region
    $region6: #{tpu_custom_call.1} parent=1 // pred_check
      _
    $region7: #{tpu_custom_call.1} parent=1 // pred_check_branch
      %20 = sbr.rel (0) target = $region9
    $region8: #{tpu_custom_call.1} parent=1 // pred_region
      _
    $region9: #{tpu_custom_call.1} parent=1 // pred_fallthru
      _
    // Predicated region
    $region10: #{tpu_custom_call.1} parent=1 // pred_check
      _
    $region11: #{tpu_custom_call.1} parent=1 // pred_check_branch
      %22 = sbr.rel (0) target = $region13
    $region12: #{tpu_custom_call.1} parent=1 // pred_region
      _
    $region13: #{tpu_custom_call.1} parent=1 // pred_fallthru
      _
    // Predicated region
    $region14: #{tpu_custom_call.1} parent=1 // pred_check
      _
    $region15: #{tpu_custom_call.1} parent=1 // pred_check_branch
      %24 = sbr.rel (0) target = $region17
    $region16: #{tpu_custom_call.1} parent=1 // pred_region
      _
    $region17: #{tpu_custom_call.1} parent=1 // pred_fallthru
      _
    // Predicated region
    $region18: #{tpu_custom_call.1} parent=1 // pred_check
      _
    $region19: #{tpu_custom_call.1} parent=1 // pred_check_branch
      %26 = sbr.rel (0) target = $region21
    $region20: #{tpu_custom_call.1} parent=1 // pred_region
      _
    $region21: #{tpu_custom_call.1} parent=1 // pred_fallthru
      _
    // Predicated region
    $region22: #{tpu_custom_call.1} parent=1 // pred_check
      _
    $region23: #{tpu_custom_call.1} parent=1 // pred_check_branch
      %28 = sbr.rel (0) target = $region25
    $region24: #{tpu_custom_call.1} parent=1 // pred_region
      _
    $region25: #{tpu_custom_call.1} parent=1 // pred_fallthru
      _
    // Predicated region
    $region26: #{tpu_custom_call.1} parent=1 // pred_check
      _
    $region27: #{tpu_custom_call.1} parent=1 // pred_check_branch
      %30 = sbr.rel (0) target = $region29
    $region28: #{tpu_custom_call.1} parent=1 // pred_region
      _
    $region29: #{tpu_custom_call.1} parent=1 // pred_fallthru
      _
    // Predicated region
    $region30: #{tpu_custom_call.1} parent=1 // pred_check
      _
    $region31: #{tpu_custom_call.1} parent=1 // pred_check_branch
      %32 = sbr.rel (0) target = $region33
    $region32: #{tpu_custom_call.1} parent=1 // pred_region
      _
    $region33: #{tpu_custom_call.1} parent=1 // pred_fallthru
      _
    // Predicated region
    $region34: #{tpu_custom_call.1} parent=1 // pred_check
      _
    $region35: #{tpu_custom_call.1} parent=1 // pred_check_branch
      %34 = sbr.rel (0) target = $region37
    $region36: #{tpu_custom_call.1} parent=1 // pred_region
      _
    $region37: #{tpu_custom_call.1} parent=1 // pred_fallthru
      _
    // Predicated region
    $region38: #{tpu_custom_call.1} parent=1 // pred_check
      _
    $region39: #{tpu_custom_call.1} parent=1 // pred_check_branch
      %36 = sbr.rel (0) target = $region41
    $region40: #{tpu_custom_call.1} parent=1 // pred_region
      _
    $region41: #{tpu_custom_call.1} parent=1 // pred_fallthru
      _
    // Predicated region
    $region42: #{tpu_custom_call.1} parent=1 // pred_check
      _
    $region43: #{tpu_custom_call.1} parent=1 // pred_check_branch
      %38 = sbr.rel (0) target = $region45
    $region44: #{tpu_custom_call.1} parent=1 // pred_region
      _
    $region45: #{tpu_custom_call.1} parent=1 // pred_fallthru
      _
    %v40 = vld [vmem:[%s1] sm:$0x1]
    %v41 = vld [vmem:[%s0] sm:$0x3]
    %42 = vst [vmem:[#allocation2] sm:$0x3] %v41
    %s43 = scalar_lea.vmem %s0, 4
    %v44 = vld [vmem:[%s43] sm:$0x3]
    %s46 = scalar_lea.vmem [#allocation1], 1
    %47 = vst [vmem:[%s46] ss:$2 sm:$0xff] %v44
    %v48 = vld.sshfl [vmem:[#allocation1] sm:$0xff pattern:$0x75643120]
    %50 = vst [vmem:[#allocation2] sm:$0xc] %v48
    %v51 = vld [vmem:[%s0] sm:$0xf]
    %53 = vst [vmem:[#allocation1] ss:$2 sm:$0xff] %v51
    %v54 = vld.sshfl [vmem:[#allocation1] sm:$0xff pattern:$0x75643120]
    %56 = vrot.lane.b32.xlu0 %v54, 127
    %v57 = vpop.permute.xlu0 %56
    %v58 = vrot.slane %v57, 4
    %vm59 = vcmask 1039360
    %v60 = vsel %vm59, %v57, %v58
    %62 = vst [vmem:[#allocation2 + $0x4] sm:$0x3] %v60
    %v63 = vld [vmem:[%s2] sm:$0xf]
    %v64 = vld [vmem:[#allocation2] sm:$0xf]
    %v65 = vld [vmem:[#allocation2 + $0x4] sm:$0x3]
    %v68 = vunpack.c.l.b16 %v64
    %v69 = vunpack.c.l.b16 %v65
    %v70 = vpack.c.b16 %v69, %v68
    %vm71 = vcmask 97280
    %v73 = vsel %vm71, %v63, 0
    %vm75 = vcmask 1045504
    %v77 = vsel %vm75, %v70, 0
    %79 = vmatpush.bf16.msra.mxu0 0
    %80 = vmatpush.bf16.msra.mxu0 0
    %81 = vmatpush.bf16.msra.mxu0 0
    %82 = vmatpush.bf16.msra.mxu0 0
    %83 = vmatpush.bf16.msra.mxu0 0
    %84 = vmatpush.bf16.msra.mxu0 0
    %85 = vmatpush.bf16.msra.mxu0 0
    %86 = vmatpush.bf16.msra.mxu0 %v77
    %87 = vmatmul.bf16.gmra.mxu0 %v73
    %v88 = vpop.f32.mrf.mxu0
    %v89 = vadd.f32 0.0, %v88
    %v90 = vpop.f32.mrf.mxu0
    %91 = vdwg.mxu0
    %92 = vst [vmem:[#allocation4] sm:$0xff] %v89
    %v93 = vld [vmem:[#allocation4] sm:$0xff]
    %v95 = vperm.slane %v40, 0
    %v97 = vmul.f32 %v93, %v95
    %98 = vadd.xlane.f32.xlu0 %v97
    %v99 = vpop.xlane.xlu0 %98
    %v100 = vmul.f32 %v99, 0.0625
    %v101 = vsub.f32 %v93, %v100
    %v102 = vmul.f32 %v101, %v95
    %v103 = vmul.f32 %v102, %v102
    %104 = vadd.xlane.f32.xlu0 %v103
    %v105 = vpop.xlane.xlu0 %104
    %v106 = vmul.f32 %v105, 0.0625
    %v107 = vld [vmem:[%s3] sm:$0xff]
    %v108 = vadd.f32 %v106, 1e-05
    %v109 = vrsqrt.pop %v108
    %v110 = vmul.f32 %v109, %v108
    %v111 = vmul.f32 %v110, %v109
    %v112 = vmul.f32 0.5, %v111
    %v113 = vsub.f32 1.5, %v112
    %v114 = vmul.f32 %v109, %v113
    %vm115 = vweird.f32 %v108
    %vm116 = vweird.f32 %v109
    %vm117 = vmor %vm115, %vm116
    %v118 = vsel %vm117, %v109, %v114
    %v119 = vmul.f32 %v107, %v118
    %v120 = vld [vmem:[%s4] sm:$0xff]
    %v121 = vmul.f32 %v100, %v119
    %v122 = vsub.f32 %v120, %v121
    %124 = vset.pattern.permute.xlu0 0
    %125 = vperm.xlu0 %124, %v119
    %v126 = vpop.permute.xlu0 %125
    %v128 = vmul.f32 %v93, %v126
    %130 = vset.pattern.permute.xlu0 0
    %131 = vperm.xlu0 %130, %v122
    %v132 = vpop.permute.xlu0 %131
    %v134 = vadd.f32 %v128, %v132
    %vm135 = vcmp.ge.f32.partialorder %v134, 0.0
    %v136 = vmul.f32 %v134, 0.2
    %v137 = vsel %vm135, %v134, %v136
    %v138 = vmul.f32 %v137, %v95
    %v139 = vpack.c.bf16 %v138, %v138
    %141 = vrot.lane.b32.xlu0 %v139, 1
    %v142 = vpop.permute.xlu0 %141
    %v143 = vrot.slane %v142, 4
    %vm144 = vcmask 7168
    %v145 = vsel %vm144, %v143, %v142
    %vm147 = vcmask 1043464
    %vm148 = vcmask 7172
    %vm149 = vmor %vm148, %vm147
    %150 = vst.msk [vmem:[#allocation7] sm:$0xff] %vm149, %v145
    %vm151 = vcmask 3072
    %152 = vst.msk [vmem:[#allocation7] sm:$0xf] %vm151, 0
    %153 = vst.msk [vmem:[#allocation7 + $0x4] sm:$0xf] %vm147, 0
    %v154 = vld [vmem:[#allocation7] sm:$0xf]
    %155 = vst [vmem:[#allocation3] sm:$0xf] %v154
    %v156 = vld [vmem:[#allocation7] sm:$0xff]
    %158 = vrot.lane.b32.xlu0 %v156, 127
    %v159 = vpop.permute.xlu0 %158
    %v160 = vrot.slane %v159, 4
    %v161 = vsel %vm59, %v159, %v160
    %163 = vst [vmem:[#allocation3 + $0x4] sm:$0xf] %v161
    %v164 = vld [vmem:[#allocation7] sm:$0xff]
    %166 = vrot.lane.b32.xlu0 %v164, 126
    %v167 = vpop.permute.xlu0 %166
    %v168 = vrot.slane %v167, 4
    %vm169 = vcmask 1031168
    %v170 = vsel %vm169, %v167, %v168
    %172 = vst [vmem:[#allocation3 + $0x8] sm:$0xf] %v170
    %v173 = vld [vmem:[%s5] sm:$0xf]
    %v174 = vld [vmem:[#allocation3] sm:$0xf]
    %v175 = vld [vmem:[#allocation3 + $0x4] sm:$0xf]
    %v176 = vld [vmem:[#allocation3 + $0x8] sm:$0xf]
    %v180 = vunpack.c.l.b16 %v174
    %v181 = vunpack.c.l.b16 %v175
    %v182 = vunpack.c.l.b16 %v176
    %v183 = vpack.c.b16 %v181, %v180
    %v184 = vpack.c.b16 %v182, %v182
    %vm186 = vcmask 195584
    %v188 = vsel %vm186, %v173, 0
    %vm190 = vcmask 1043456
    %v192 = vsel %vm190, %v184, 0
    %194 = vmatpush.bf16.msra.mxu0 0
    %195 = vmatpush.bf16.msra.mxu0 0
    %196 = vmatpush.bf16.msra.mxu0 0
    %197 = vmatpush.bf16.msra.mxu0 0
    %198 = vmatpush.bf16.msra.mxu0 0
    %199 = vmatpush.bf16.msra.mxu0 0
    %200 = vmatpush.bf16.msra.mxu0 %v192
    %201 = vmatpush.bf16.msra.mxu0 %v183
    %202 = vmatmul.bf16.gmra.mxu0 %v188
    %v203 = vpop.f32.mrf.mxu0
    %v204 = vadd.f32 0.0, %v203
    %v205 = vpop.f32.mrf.mxu0
    %206 = vdwg.mxu0
    %207 = vst [vmem:[#allocation5] sm:$0xff] %v204
    %v208 = vld [vmem:[#allocation5] sm:$0xff]
    %v209 = vmul.f32 %v208, %v95
    %210 = vadd.xlane.f32.xlu0 %v209
    %v211 = vpop.xlane.xlu0 %210
    %v212 = vmul.f32 %v211, 0.0625
    %v213 = vsub.f32 %v208, %v212
    %v214 = vmul.f32 %v213, %v95
    %v215 = vmul.f32 %v214, %v214
    %216 = vadd.xlane.f32.xlu0 %v215
    %v217 = vpop.xlane.xlu0 %216
    %v218 = vmul.f32 %v217, 0.0625
    %v219 = vld [vmem:[%s6] sm:$0xff]
    %v220 = vadd.f32 %v218, 1e-05
    %v221 = vrsqrt.pop %v220
    %v222 = vmul.f32 %v221, %v220
    %v223 = vmul.f32 %v222, %v221
    %v224 = vmul.f32 0.5, %v223
    %v225 = vsub.f32 1.5, %v224
    %v226 = vmul.f32 %v221, %v225
    %vm227 = vweird.f32 %v220
    %vm228 = vweird.f32 %v221
    %vm229 = vmor %vm227, %vm228
    %v230 = vsel %vm229, %v221, %v226
    %v231 = vmul.f32 %v219, %v230
    %v232 = vld [vmem:[%s7] sm:$0xff]
    %v233 = vmul.f32 %v212, %v231
    %v234 = vsub.f32 %v232, %v233
    %v235 = vld [vmem:[%s8] sm:$0xf]
    %v236 = vld [vmem:[%s43] sm:$0x3]
    %vm237 = vcmask 31744
    %v239 = vsel %vm237, %v235, 0
    %vm241 = vcmask 1041408
    %v243 = vsel %vm241, %v236, 0
    %245 = vmatpush.bf16.msra.mxu0 0
    %246 = vmatpush.bf16.msra.mxu0 0
    %247 = vmatpush.bf16.msra.mxu0 0
    %248 = vmatpush.bf16.msra.mxu0 0
    %249 = vmatpush.bf16.msra.mxu0 0
    %250 = vmatpush.bf16.msra.mxu0 0
    %251 = vmatpush.bf16.msra.mxu0 0
    %252 = vmatpush.bf16.msra.mxu0 %v243
    %253 = vmatmul.bf16.gmra.mxu0 %v239
    %v254 = vpop.f32.mrf.mxu0
    %v255 = vadd.f32 0.0, %v254
    %v256 = vpop.f32.mrf.mxu0
    %257 = vdwg.mxu0
    %258 = vst [vmem:[#allocation6] sm:$0xff] %v255
    %v259 = vld [vmem:[#allocation6] sm:$0xff]
    %v260 = vmul.f32 %v259, %v95
    %261 = vadd.xlane.f32.xlu0 %v260
    %v262 = vpop.xlane.xlu0 %261
    %v263 = vmul.f32 %v262, 0.0625
    %v264 = vsub.f32 %v259, %v263
    %v265 = vmul.f32 %v264, %v95
    %v266 = vmul.f32 %v265, %v265
    %267 = vadd.xlane.f32.xlu0 %v266
    %v268 = vpop.xlane.xlu0 %267
    %v269 = vmul.f32 %v268, 0.0625
    %v270 = vld [vmem:[%s9] sm:$0xff]
    %v271 = vadd.f32 %v269, 1e-05
    %v272 = vrsqrt.pop %v271
    %v273 = vmul.f32 %v272, %v271
    %v274 = vmul.f32 %v273, %v272
    %v275 = vmul.f32 0.5, %v274
    %v276 = vsub.f32 1.5, %v275
    %v277 = vmul.f32 %v272, %v276
    %vm278 = vweird.f32 %v271
    %vm279 = vweird.f32 %v272
    %vm280 = vmor %vm278, %vm279
    %v281 = vsel %vm280, %v272, %v277
    %v282 = vmul.f32 %v270, %v281
    %v283 = vld [vmem:[%s10] sm:$0xff]
    %v284 = vmul.f32 %v263, %v282
    %v285 = vsub.f32 %v283, %v284
    %287 = vset.pattern.permute.xlu0 0
    %288 = vperm.xlu0 %287, %v282
    %v289 = vpop.permute.xlu0 %288
    %v291 = vmul.f32 %v259, %v289
    %293 = vset.pattern.permute.xlu0 0
    %294 = vperm.xlu0 %293, %v285
    %v295 = vpop.permute.xlu0 %294
    %v297 = vadd.f32 %v291, %v295
    %v298 = vld [vmem:[#allocation5] sm:$0xff]
    %300 = vset.pattern.permute.xlu0 0
    %301 = vperm.xlu0 %300, %v231
    %v302 = vpop.permute.xlu0 %301
    %v304 = vmul.f32 %v298, %v302
    %306 = vset.pattern.permute.xlu0 0
    %307 = vperm.xlu0 %306, %v234
    %v308 = vpop.permute.xlu0 %307
    %v310 = vadd.f32 %v304, %v308
    %v311 = vadd.f32 %v310, %v297
    %vm312 = vcmp.ge.f32.partialorder %v311, 0.0
    %v313 = vmul.f32 %v311, 0.2
    %v314 = vsel %vm312, %v311, %v313
    %315 = vst [vmem:[#allocation8] sm:$0xff] %v314
    // Predicated region
    $region46: #{tpu_custom_call.1} parent=1 // pred_check
      _
    $region47: #{tpu_custom_call.1} parent=1 // pred_check_branch
      %317 = sbr.rel (0) target = $region49
    $region48: #{tpu_custom_call.1} parent=1 // pred_region
      %319 = vsyncadd [#allocation9], 0
      %s321 = sshll.u32 [#allocation8], 4
      %s322 = int_to_ptr.vmem [resolvable:$true] %s321
      %s323 = sshll.u32 %s11, 4
      %s324 = int_to_ptr.hbm [resolvable:$true] %s323
      %326 = dma.vmem_to_hbm [thread:$0]  %s322, 128, %s324, [#allocation9]
    $region49: #{tpu_custom_call.1} parent=1 // pred_fallthru
      _
    // Predicated region
    $region50: #{tpu_custom_call.1} parent=1 // pred_check
      _
    $region51: #{tpu_custom_call.1} parent=1 // pred_check_branch
      %328 = sbr.rel (0) target = $region53
    $region52: #{tpu_custom_call.1} parent=1 // pred_region
      %330 = dma.done [#allocation9], 128
    $region53: #{tpu_custom_call.1} parent=1 // pred_fallthru
      _
    %331 = vsyncpa [#allocation9], 1

</llo_original>
